<compile_context>
chip_gen: v7x
topology: tpu7x:2x2x1
jax: 0.10.0
libtpu: 0.0.40
codegen_flags: <defaults>
</compile_context>

<pallas_src>
import functools

import jax
import jax.numpy as jnp
from jax.experimental import pallas as pl
from jax.experimental.pallas import tpu as pltpu

LANES = 128
SUBLANES = 8
ACC_ROWS = 32                    # per-split accumulator rows -> 8 independent vreg chains
BLOCK_BYTES_F32 = 4 << 20        # per-block f32-expanded working-set budget (4 MiB)
VMEM_LIMIT_BYTES = 32 << 20      # raise v5e's 16 MiB scoped default; fits v7x's 64 MiB physical


def _sumsq_kernel(out_ref, tgt_ref, acc_ref, *, n_rows, steps):
    """Accumulate per-lane partial sums of (out - tgt)^2 into a resident VMEM block.

    Grid: (splits, steps). Axis 0 is 'parallel' (megacore split of the row range),
    axis 1 is the 'arbitrary' reduction axis; the output block (indexed only by the
    split) stays resident in VMEM across it and acts as the accumulator.
    """
    c = pl.program_id(0)   # split (parallel)
    i = pl.program_id(1)   # reduction step within split (arbitrary)

    @pl.when(i == 0)
    def _():
        acc_ref[...] = jnp.zeros_like(acc_ref)

    block_rows = out_ref.shape[0]
    blk = c * steps + i    # logical (unclamped) block index

    d = out_ref[...].astype(jnp.float32) - tgt_ref[...].astype(jnp.float32)
    sq = d * d

    # Static fold width: 32 rows (8 vreg accumulator chains) when possible.
    if block_rows % ACC_ROWS == 0:
        fold = ACC_ROWS
    elif block_rows % SUBLANES == 0:
        fold = SUBLANES
    else:
        fold = 0

    def accumulate(vals):
        if fold:
            # Pure VPU adds over the major axis (no XLU in the hot loop).
            acc_ref[0:fold, :] += vals.reshape(block_rows // fold, fold, LANES).sum(axis=0)
        else:
            # Tiny single-block case (block == full array, rows not a multiple of 8).
            acc_ref[0:1, :] += jnp.sum(vals, axis=0, keepdims=True)

    # Interior blocks are fully covered by real rows -> no mask needed.
    # The condition also catches clamped duplicate blocks (blk past the array),
    # whose rows are all >= n_rows and get zeroed in the masked branch.
    is_full = (blk + 1) * block_rows <= n_rows

    @pl.when(is_full)
    def _():
        accumulate(sq)

    @pl.when(jnp.logical_not(is_full))
    def _():
        row_ids = blk * block_rows + jax.lax.broadcasted_iota(jnp.int32, sq.shape, 0)
        accumulate(jnp.where(row_ids < n_rows, sq, 0.0))


def pool_and_reshape(x, tensor_shape):
    """Equivalent of Base_Loss.pool_and_reshape_output / _target: view([-1, *tensor_shape])."""
    return jnp.reshape(x, (-1, *tensor_shape))


def _pick_block_rows(rows):
    # Budget on the f32-expanded per-block working set so in-kernel intermediates
    # (diff/square in f32) stay bounded regardless of the input dtype.
    target = BLOCK_BYTES_F32 // (LANES * 4)              # 8192 rows
    target = max((target // ACC_ROWS) * ACC_ROWS, ACC_ROWS)
    return target if rows >= target else rows            # block == full array is always legal


def _default_num_splits():
    # 2 splits only helps on chips with 2 TensorCores per device (v4/v5p/v7x);
    # on single-TC v5e/v6e (and v2/v3) the extra split is pure overhead.
    try:
        kind = (getattr(jax.devices()[0], "device_kind", "") or "").lower()
    except Exception:
        kind = ""
    single_tc_tags = ("v2", "v3", "v5 lite", "v5e", "v5litepod", "v6 lite", "v6e")
    if any(tag in kind for tag in single_tc_tags):
        return 1
    return 2


def base_loss_forward(output, target, tensor_shape, coef=1.0, num_splits=None):
    # TODO(synk): Base_Loss.forward is abstract in PyTorch; this implements the canonical
    # concrete loss (coef-scaled MSE) on the pool_and_reshape'd tensors.
    out = pool_and_reshape(output, tensor_shape)
    tgt = pool_and_reshape(target, tensor_shape)
    n_elems = out.size
    if n_elems == 0:
        return jnp.float32(0.0)

    out_flat = jnp.ravel(out)
    tgt_flat = jnp.ravel(tgt)

    rows = -(-n_elems // LANES)            # ceil(n_elems / 128)
    n_pad = rows * LANES - n_elems
    if n_pad:
        # TODO(synk): misaligned (n % 128 != 0) shapes pay one zero-pad copy per array;
        # zero-padded positions contribute (0-0)^2 = 0, so no per-element masking is needed.
        out_flat = jnp.pad(out_flat, (0, n_pad))
        tgt_flat = jnp.pad(tgt_flat, (0, n_pad))
    # Aligned shapes: pure zero-copy reshape into a lane-dense [rows, 128] slab.
    out2d = out_flat.reshape(rows, LANES)
    tgt2d = tgt_flat.reshape(rows, LANES)

    blk_rows = _pick_block_rows(rows)
    total_blocks = -(-rows // blk_rows)
    if num_splits is None:
        num_splits = _default_num_splits()
    splits = num_splits if total_blocks >= num_splits else 1
    steps = -(-total_blocks // splits)
    last_blk = total_blocks - 1

    def in_map(c, i):
        # Clamp so a padded split never asks for a block index past the array;
        # the in-kernel masked branch zeroes any duplicated data.
        return (jnp.minimum(c * steps + i, last_blk), 0)

    kernel = functools.partial(_sumsq_kernel, n_rows=int(rows), steps=int(steps))

    bytes_accessed = rows * LANES * (out2d.dtype.itemsize + tgt2d.dtype.itemsize) \
        + splits * ACC_ROWS * LANES * 4
    cost = pl.CostEstimate(flops=3 * rows * LANES, transcendentals=0,
                           bytes_accessed=bytes_accessed)

    partials = pl.pallas_call(
        kernel,
        out_shape=jax.ShapeDtypeStruct((splits * ACC_ROWS, LANES), jnp.float32),
        grid_spec=pltpu.PrefetchScalarGridSpec(
            num_scalar_prefetch=0,
            grid=(splits, steps),
            in_specs=[
                pl.BlockSpec((blk_rows, LANES), in_map),
                pl.BlockSpec((blk_rows, LANES), in_map),
            ],
            # Per-split (32, 128) partial-sum block; same block across the
            # reduction axis -> resident VMEM accumulator.
            out_specs=pl.BlockSpec((ACC_ROWS, LANES), lambda c, i: (c, 0)),
        ),
        compiler_params=pltpu.CompilerParams(
            dimension_semantics=("parallel", "arbitrary"),
            vmem_limit_bytes=VMEM_LIMIT_BYTES,
        ),
        cost_estimate=cost,
    )(out2d, tgt2d)

    # Single cross-lane/sublane reduce, once, outside the hot loop.
    total = jnp.sum(partials)
    return jnp.float32(coef) * total / jnp.float32(n_elems)


if __name__ == "__main__":
    # Deterministic "config" mirroring Base_Loss.__init__ lookups:
    #   tensor_shape comes from the modality, coef from loss_cfgs['loss_coef'].
    tensor_shape = (4, 16, 16)   # modality.get_tensor_shape()  (C, H, W)
    coef = 0.5                   # get_cfgs('loss_coef', default=1.0)

    key = jax.random.PRNGKey(0)
    k_out, k_tgt = jax.random.split(key)
    batch = 2
    # NCHW inputs (arbitrary leading batch; pool_and_reshape views them as [-1, *tensor_shape]).
    output = jax.random.normal(k_out, (batch, *tensor_shape), dtype=jnp.float32)
    target = jax.random.normal(k_tgt, (batch, *tensor_shape), dtype=jnp.float32)

    loss = base_loss_forward(output, target, tensor_shape, coef=coef)
    loss = jax.block_until_ready(loss)

    # Pure-JAX reference check of the same semantics.
    ref = coef * jnp.mean(
        (pool_and_reshape(output, tensor_shape) - pool_and_reshape(target, tensor_shape)) ** 2
    )
    assert jnp.allclose(loss, ref, rtol=1e-5, atol=1e-5), (loss, ref)

    print("KERNEL_OK")
</pallas_src>

<mosaic_0001>
module attributes {stable_mosaic.version = 11 : i64} {
  func.func @_sumsq_kernel(%arg0: i32, %arg1: i32, %arg2: memref<16x128xf32, #tpu.memory_space<vmem>>, %arg3: memref<16x128xf32, #tpu.memory_space<vmem>>, %arg4: memref<32x128xf32, #tpu.memory_space<vmem>>) attributes {dimension_semantics = [#tpu.dimension_semantics<parallel>, #tpu.dimension_semantics<arbitrary>], iteration_bounds = array<i64: 1, 1>, scalar_prefetch = 0 : i64, scratch_operands = 0 : i64, tpu.core_type = #tpu.core_type<tc>, window_params = [{transform_indices = @transform_0, window_bounds = array<i64: 16, 128>}, {transform_indices = @transform_1, window_bounds = array<i64: 16, 128>}, {transform_indices = @transform_2, window_bounds = array<i64: 32, 128>}]} {
    %c0_i32 = arith.constant 0 : i32
    %0 = arith.cmpi eq, %arg1, %c0_i32 : i32
    %1 = arith.extui %0 : i1 to i32
    %c0_i32_0 = arith.constant 0 : i32
    %2 = arith.cmpi ne, %1, %c0_i32_0 : i32
    scf.if %2 {
      %cst = arith.constant 0.000000e+00 : f32
      %17 = vector.broadcast %cst : f32 to vector<32x128xf32>
      %c0_8 = arith.constant 0 : index
      %c0_9 = arith.constant 0 : index
      %18 = vector.load %arg4[%c0_8, %c0_9] : memref<32x128xf32, #tpu.memory_space<vmem>>, vector<32x128xf32>
      tpu.vector_store %arg4[%c0_8, %c0_9], %17 {strides = array<i32>} : memref<32x128xf32, #tpu.memory_space<vmem>>, vector<32x128xf32>,
    } else {
    }
    %c1_i32 = arith.constant 1 : i32
    %3 = arith.muli %arg0, %c1_i32 : i32
    %4 = arith.addi %3, %arg1 : i32
    %c0 = arith.constant 0 : index
    %c0_1 = arith.constant 0 : index
    %5 = vector.load %arg2[%c0, %c0_1] : memref<16x128xf32, #tpu.memory_space<vmem>>, vector<16x128xf32>
    %c0_2 = arith.constant 0 : index
    %c0_3 = arith.constant 0 : index
    %6 = vector.load %arg3[%c0_2, %c0_3] : memref<16x128xf32, #tpu.memory_space<vmem>>, vector<16x128xf32>
    %7 = arith.subf %5, %6 : vector<16x128xf32>
    %8 = arith.mulf %7, %7 : vector<16x128xf32>
    %c1_i32_4 = arith.constant 1 : i32
    %9 = arith.addi %4, %c1_i32_4 : i32
    %c16_i32 = arith.constant 16 : i32
    %10 = arith.muli %9, %c16_i32 : i32
    %c16_i32_5 = arith.constant 16 : i32
    %11 = arith.cmpi sle, %10, %c16_i32_5 : i32
    %12 = arith.extui %11 : i1 to i32
    %c0_i32_6 = arith.constant 0 : i32
    %13 = arith.cmpi ne, %12, %c0_i32_6 : i32
    scf.if %13 {
      %c0_8 = arith.constant 0 : index
      %c0_9 = arith.constant 0 : index
      %17 = vector.load %arg4[%c0_8, %c0_9] : memref<32x128xf32, #tpu.memory_space<vmem>>, vector<8x128xf32>
      %18 = vector.shape_cast %8 : vector<16x128xf32> to vector<2x8x128xf32>
      %cst = arith.constant dense<0.000000e+00> : vector<8x128xf32>
      %19 = vector.multi_reduction <add>, %18, %cst [0] : vector<2x8x128xf32> to vector<8x128xf32>
      %20 = arith.addf %17, %19 : vector<8x128xf32>
      %c0_10 = arith.constant 0 : index
      %c0_11 = arith.constant 0 : index
      %21 = vector.load %arg4[%c0_10, %c0_11] : memref<32x128xf32, #tpu.memory_space<vmem>>, vector<8x128xf32>
      tpu.vector_store %arg4[%c0_10, %c0_11], %20 {strides = array<i32>} : memref<32x128xf32, #tpu.memory_space<vmem>>, vector<8x128xf32>,
    } else {
    }
    %true = arith.constant true
    %14 = arith.xori %11, %true : i1
    %15 = arith.extui %14 : i1 to i32
    %c0_i32_7 = arith.constant 0 : i32
    %16 = arith.cmpi ne, %15, %c0_i32_7 : i32
    scf.if %16 {
      %c16_i32_8 = arith.constant 16 : i32
      %17 = arith.muli %4, %c16_i32_8 : i32
      %18 = tpu.iota {dimensions = array<i32: 0>} : vector<16x128xi32>
      %19 = vector.broadcast %17 : i32 to vector<16x128xi32>
      %20 = arith.addi %19, %18 : vector<16x128xi32>
      %c16_i32_9 = arith.constant 16 : i32
      %21 = vector.broadcast %c16_i32_9 : i32 to vector<16x128xi32>
      %22 = arith.cmpi slt, %20, %21 : vector<16x128xi32>
      %cst = arith.constant 0.000000e+00 : f32
      %23 = vector.broadcast %cst : f32 to vector<16x128xf32>
      %24 = arith.select %22, %8, %23 : vector<16x128xi1>, vector<16x128xf32>
      %c0_10 = arith.constant 0 : index
      %c0_11 = arith.constant 0 : index
      %25 = vector.load %arg4[%c0_10, %c0_11] : memref<32x128xf32, #tpu.memory_space<vmem>>, vector<8x128xf32>
      %26 = vector.shape_cast %24 : vector<16x128xf32> to vector<2x8x128xf32>
      %cst_12 = arith.constant dense<0.000000e+00> : vector<8x128xf32>
      %27 = vector.multi_reduction <add>, %26, %cst_12 [0] : vector<2x8x128xf32> to vector<8x128xf32>
      %28 = arith.addf %25, %27 : vector<8x128xf32>
      %c0_13 = arith.constant 0 : index
      %c0_14 = arith.constant 0 : index
      %29 = vector.load %arg4[%c0_13, %c0_14] : memref<32x128xf32, #tpu.memory_space<vmem>>, vector<8x128xf32>
      tpu.vector_store %arg4[%c0_13, %c0_14], %28 {strides = array<i32>} : memref<32x128xf32, #tpu.memory_space<vmem>>, vector<8x128xf32>,
    } else {
    }
    return
  }
  func.func @transform_0(%arg0: i32, %arg1: i32) -> (i32, i32) {
    %c1_i32 = arith.constant 1 : i32
    %0 = arith.muli %arg0, %c1_i32 : i32
    %1 = arith.addi %0, %arg1 : i32
    %c0_i32 = arith.constant 0 : i32
    %2 = arith.minsi %1, %c0_i32 : i32
    %c0_i32_0 = arith.constant 0 : i32
    %c0_i32_1 = arith.constant 0 : i32
    return %2, %c0_i32_0 : i32, i32
  }
  func.func @transform_1(%arg0: i32, %arg1: i32) -> (i32, i32) {
    %c1_i32 = arith.constant 1 : i32
    %0 = arith.muli %arg0, %c1_i32 : i32
    %1 = arith.addi %0, %arg1 : i32
    %c0_i32 = arith.constant 0 : i32
    %2 = arith.minsi %1, %c0_i32 : i32
    %c0_i32_0 = arith.constant 0 : i32
    %c0_i32_1 = arith.constant 0 : i32
    return %2, %c0_i32_0 : i32, i32
  }
  func.func @transform_2(%arg0: i32, %arg1: i32) -> (i32, i32) {
    %c0_i32 = arith.constant 0 : i32
    %c0_i32_0 = arith.constant 0 : i32
    return %arg0, %c0_i32 : i32, i32
  }
}

</mosaic_0001>

<llo_original>
// kernel: tpu_custom_call.1
$region0: #{tpu_custom_call.1}
  #allocation0 [shape = 'u32[]', space=smem, size = 0x4, offset = 0x4, fixed_abs, tag = 'smem constant byte address 0x4 - core index']
  #allocation1 [shape = 'u32[144,128]{1,0:T(1,128)}', space=vmem, size = 0x12000, scoped, tag = 'internal scratch']
  %s0 = inlined_call_operand.hbm [shape: f32[16,128], index: 0, kind: input, shape index: {}]
  %s1 = inlined_call_operand.hbm [shape: f32[16,128], index: 1, kind: input, shape index: {}]
  %s2 = inlined_call_operand.hbm [shape: f32[32,128], index: 2, kind: output, shape index: {}]
  %s3 = sld [smem:[#allocation0]]
  $region38: #{tpu_custom_call.1} parent=0
    _
  %s5 = ssub.s32 1, %s3
  %s6 = scalar_select 0, %s5, %s3
  $region1: #{tpu_custom_call.1} parent=0
    #allocation2 [shape = 'u8[8192]{0}', space=vmem, size = 0x2000, scoped, tag = 'input window, operand 0, single buffered']
    #allocation3 [shape = 's32[1]{0}', space=sflag, size = 0x4, scoped, tag = 'scoped memory for tpu_custom_call.1']
    #allocation4 [shape = 's32[1]{0}', space=sflag, size = 0x4, scoped, tag = 'scoped memory for tpu_custom_call.1']
    #allocation5 [shape = 'u8[8192]{0}', space=vmem, size = 0x2000, scoped, tag = 'input window, operand 1, single buffered']
    #allocation6 [shape = 's32[1]{0}', space=sflag, size = 0x4, scoped, tag = 'scoped memory for tpu_custom_call.1']
    #allocation7 [shape = 'u8[16384]{0}', space=vmem, size = 0x4000, scoped, tag = 'output window, operand 0, single buffered']
    %7 = vsyncpa [#allocation3], 0
    %8 = vsyncpa [#allocation6], 0
    %9 = vsyncpa [#allocation4], 0
    // Predicated region
    $region2: #{tpu_custom_call.1} parent=1 // pred_check
      _
    $region3: #{tpu_custom_call.1} parent=1 // pred_check_branch
      %11 = sbr.rel (0) target = $region5
    $region4: #{tpu_custom_call.1} parent=1 // pred_region
      %s12 = sadd.s32 0, 0
      %p13 = scmp.lt.s32.totalorder %s12, 0
      %s14 = scalar_select %p13, %s12, 0
      %s15 = smul.u32 2, %s14
      %s17 = ssub.s32 256, 256
      %18 = vsyncadd [#allocation3], %s17
      %s19 = smul.addr %s15, 128
      %s20 = scalar_lea.hbm %s0, %s19
      %s21 = sshll.u32 [#allocation2], 4
      %s22 = int_to_ptr.vmem [resolvable:$true] %s21
      %27 = dma.hbm_to_vmem [thread:$0]  %s20, 256, %s22, [#allocation3], 128, 128, 8
    $region5: #{tpu_custom_call.1} parent=1 // pred_fallthru
      _
    // Predicated region
    $region6: #{tpu_custom_call.1} parent=1 // pred_check
      _
    $region7: #{tpu_custom_call.1} parent=1 // pred_check_branch
      %29 = sbr.rel (0) target = $region9
    $region8: #{tpu_custom_call.1} parent=1 // pred_region
      %s30 = sadd.s32 0, 0
      %p31 = scmp.lt.s32.totalorder %s30, 0
      %s32 = scalar_select %p31, %s30, 0
      %s33 = smul.u32 2, %s32
      %s35 = ssub.s32 256, 256
      %36 = vsyncadd [#allocation6], %s35
      %s37 = smul.addr %s33, 128
      %s38 = scalar_lea.hbm %s1, %s37
      %s39 = sshll.u32 [#allocation5], 4
      %s40 = int_to_ptr.vmem [resolvable:$true] %s39
      %45 = dma.hbm_to_vmem [thread:$0]  %s38, 256, %s40, [#allocation6], 128, 128, 8
    $region9: #{tpu_custom_call.1} parent=1 // pred_fallthru
      _
    // Predicated region
    $region10: #{tpu_custom_call.1} parent=1 // pred_check
      _
    $region11: #{tpu_custom_call.1} parent=1 // pred_check_branch
      %47 = sbr.rel (0) target = $region13
    $region12: #{tpu_custom_call.1} parent=1 // pred_region
      %48 = dma.done [#allocation3], 256
    $region13: #{tpu_custom_call.1} parent=1 // pred_fallthru
      _
    // Predicated region
    $region14: #{tpu_custom_call.1} parent=1 // pred_check
      _
    $region15: #{tpu_custom_call.1} parent=1 // pred_check_branch
      %50 = sbr.rel (0) target = $region17
    $region16: #{tpu_custom_call.1} parent=1 // pred_region
      %51 = dma.done [#allocation6], 256
    $region17: #{tpu_custom_call.1} parent=1 // pred_fallthru
      _
    %s52 = sadd.s32 0, 0
    %p53 = scmp.lt.s32.totalorder %s52, 0
    %s54 = scalar_select %p53, %s52, 0
    %s55 = smul.u32 2, %s54
    %s56 = sadd.s32 0, 0
    %p57 = scmp.lt.s32.totalorder %s56, 0
    %s58 = scalar_select %p57, %s56, 0
    %s59 = smul.u32 2, %s58
    %p60 = scmp.eq.s32.totalorder 0, 0
    // Predicated region
    $region18: #{tpu_custom_call.1} parent=1 // pred_check
      %p61 = pneg %p60
    $region19: #{tpu_custom_call.1} parent=1 // pred_check_branch
      %63 = sbr.rel (%p61) target = $region21
    $region20: #{tpu_custom_call.1} parent=1 // pred_region
      %64 = vst [vmem:[#allocation7] sm:$0xff] 0.0
      %65 = vst [vmem:[#allocation7 + $0x8] sm:$0xff] 0.0
      %66 = vst [vmem:[#allocation7 + $0x10] sm:$0xff] 0.0
      %67 = vst [vmem:[#allocation7 + $0x18] sm:$0xff] 0.0
    $region21: #{tpu_custom_call.1} parent=1 // pred_fallthru
      _
    %s68 = sadd.s32 0, 0
    %v69 = vld [vmem:[#allocation2] sm:$0xff]
    %v70 = vld [vmem:[#allocation2 + $0x8] sm:$0xff]
    %v71 = vld [vmem:[#allocation5] sm:$0xff]
    %v72 = vld [vmem:[#allocation5 + $0x8] sm:$0xff]
    %v73 = vsub.f32 %v69, %v71
    %v74 = vsub.f32 %v70, %v72
    %v75 = vmul.f32 %v73, %v73
    %v76 = vmul.f32 %v74, %v74
    %s77 = sadd.s32 %s68, 1
    %s78 = smul.u32 %s77, 16
    %p79 = scmp.le.s32.totalorder %s78, 16
    // Predicated region
    $region22: #{tpu_custom_call.1} parent=1 // pred_check
      %p80 = pneg %p79
    $region23: #{tpu_custom_call.1} parent=1 // pred_check_branch
      %82 = sbr.rel (%p80) target = $region25
    $region24: #{tpu_custom_call.1} parent=1 // pred_region
      %v83 = vld [vmem:[#allocation7] sm:$0xff]
      %v84 = vadd.f32 %v75, %v76
      %v85 = vadd.f32 %v83, %v84
      %86 = vst [vmem:[#allocation7] sm:$0xff] %v85
    $region25: #{tpu_custom_call.1} parent=1 // pred_fallthru
      _
    %p87 = scmp.gt.s32.totalorder %s78, 16
    // Predicated region
    $region26: #{tpu_custom_call.1} parent=1 // pred_check
      %p88 = pneg %p87
    $region27: #{tpu_custom_call.1} parent=1 // pred_check_branch
      %90 = sbr.rel (%p88) target = $region29
    $region28: #{tpu_custom_call.1} parent=1 // pred_region
      %s91 = smul.u32 %s68, 16
      %v92 = vlaneseq
      %v93 = vshrl.u32 %v92, 7
      %v94 = vadd.s32 %v93, 8
      %v95 = vstv %s91
      %v96 = vadd.s32 %v95, %v93
      %v97 = vadd.s32 %v95, %v94
      %vm98 = vcmp.lt.s32.totalorder %v96, 16
      %vm99 = vcmp.lt.s32.totalorder %v97, 16
      %v100 = vsel %vm98, %v75, 0.0
      %v101 = vsel %vm99, %v76, 0.0
      %v102 = vld [vmem:[#allocation7] sm:$0xff]
      %v103 = vadd.f32 %v100, %v101
      %v104 = vadd.f32 %v102, %v103
      %105 = vst [vmem:[#allocation7] sm:$0xff] %v104
    $region29: #{tpu_custom_call.1} parent=1 // pred_fallthru
      _
    // Predicated region
    $region30: #{tpu_custom_call.1} parent=1 // pred_check
      _
    $region31: #{tpu_custom_call.1} parent=1 // pred_check_branch
      %107 = sbr.rel (0) target = $region33
    $region32: #{tpu_custom_call.1} parent=1 // pred_region
      %s109 = ssub.s32 512, 512
      %110 = vsyncadd [#allocation4], %s109
      %s111 = sshll.u32 [#allocation7], 4
      %s112 = int_to_ptr.vmem [resolvable:$true] %s111
      %117 = dma.vmem_to_hbm [thread:$0]  %s112, 512, %s2, [#allocation4], 128, 128, 8
    $region33: #{tpu_custom_call.1} parent=1 // pred_fallthru
      _
    // Predicated region
    $region34: #{tpu_custom_call.1} parent=1 // pred_check
      _
    $region35: #{tpu_custom_call.1} parent=1 // pred_check_branch
      %119 = sbr.rel (0) target = $region37
    $region36: #{tpu_custom_call.1} parent=1 // pred_region
      %120 = dma.done [#allocation4], 512
    $region37: #{tpu_custom_call.1} parent=1 // pred_fallthru
      _
    %121 = vsyncpa [#allocation3], 1
    %122 = vsyncpa [#allocation6], 1
    %123 = vsyncpa [#allocation4], 1

</llo_original>
